<compile_context>
chip_gen: v7x
topology: tpu7x:2x2x1
jax: 0.10.0
libtpu: 0.0.40
codegen_flags: <defaults>
</compile_context>

<pallas_src>
import math

import jax
import jax.numpy as jnp
from jax.experimental import pallas as pl
from jax.experimental.pallas import tpu as pltpu


def _loc_attn_kernel(x_ref, p_ref, o_ref):
    # x_ref: (TN, LANE) tile of the flattened input
    # p_ref: (1, LANE) patch row (resident, same block every grid step)
    y = x_ref[...].astype(jnp.float32) * p_ref[...].astype(jnp.float32)
    # EUP-friendly sigmoid: sigmoid(y) == 0.5 * tanh(0.5 * y) + 0.5
    # (ragged last block may contain stale VMEM garbage rows; tanh cannot
    #  trap and out-of-bounds writes are masked, so this is benign here)
    o_ref[...] = (0.5 * jnp.tanh(0.5 * y) + 0.5).astype(o_ref.dtype)


def _round_up(v, m):
    return ((v + m - 1) // m) * m


def location_attention_layer(x, patch_matrix, *, target_block_bytes=2 * 1024 * 1024):
    """x: (bt, c, h, w); patch_matrix: (1, h, w). Returns sigmoid(x * patch)."""
    bt, c, h, w = x.shape
    assert patch_matrix.shape == (1, h, w), "kernel_size must equal spatial dims"

    n = bt * c
    hw = h * w

    # Match PyTorch type promotion (e.g. bf16 x * f32 patch -> f32 out).
    out_dtype = jnp.promote_types(x.dtype, patch_matrix.dtype)

    # ---- lane-dense flattening, with optional row->lane folding -------------
    p_1d = patch_matrix.reshape(hw)           # keep native dtype (no downcast)
    n_rows, lane_w = n, hw
    fold = 1
    if hw % 128 != 0:
        g = math.lcm(hw, 128) // hw
        if g > 1 and n % g == 0:
            fold = g
            n_rows = n // g
            lane_w = g * hw
    x_flat = x.reshape(n_rows, lane_w)
    if fold > 1:
        p_flat = jnp.tile(p_1d, fold).reshape(1, lane_w)
    else:
        p_flat = p_1d.reshape(1, lane_w)

    # ---- row blocking --------------------------------------------------------
    in_isz = jnp.dtype(x.dtype).itemsize
    out_isz = jnp.dtype(out_dtype).itemsize
    # sublane packing multiple: 8 (f32), 16 (bf16), 32 (int8/fp8)
    sub_mult = max(8, 32 // min(in_isz, out_isz))
    max_isz = max(in_isz, out_isz)
    rows_budget = max(
        sub_mult,
        (target_block_bytes // max(1, lane_w * max_isz)) // sub_mult * sub_mult,
    )

    if n_rows <= sub_mult:
        tn = n_rows                     # single block; tn == full dim -> layout legal
    elif n_rows <= 2 * rows_budget:
        # split into (at least) 2 blocks so v7x's second TensorCore gets work
        tn = max(sub_mult, _round_up(pl.cdiv(n_rows, 2), sub_mult))
    else:
        tn = rows_budget

    grid = (pl.cdiv(n_rows, tn),)

    cost = pl.CostEstimate(
        flops=2 * n_rows * lane_w,
        transcendentals=n_rows * lane_w,
        bytes_accessed=n_rows * lane_w * (in_isz + out_isz)
        + lane_w * jnp.dtype(patch_matrix.dtype).itemsize,
    )

    out_flat = pl.pallas_call(
        _loc_attn_kernel,
        out_shape=jax.ShapeDtypeStruct((n_rows, lane_w), out_dtype),
        grid_spec=pltpu.PrefetchScalarGridSpec(
            num_scalar_prefetch=0,
            grid=grid,
            in_specs=[
                pl.BlockSpec((tn, lane_w), lambda i: (i, 0)),   # many rows per step
                pl.BlockSpec((1, lane_w), lambda i: (0, 0)),    # resident patch row
            ],
            out_specs=pl.BlockSpec((tn, lane_w), lambda i: (i, 0)),
        ),
        compiler_params=pltpu.CompilerParams(
            dimension_semantics=("parallel",),
        ),
        cost_estimate=cost,
    )(x_flat, p_flat)

    return out_flat.reshape(bt, c, h, w)


if __name__ == "__main__":
    key = jax.random.PRNGKey(0)

    # Case 1: small shape consistent with the module; hw = 256 (lane-dense as-is).
    bt, c, h, w = 2, 4, 16, 16
    kx, kp, kx2, kp2 = jax.random.split(key, 4)
    x = jax.random.normal(kx, (bt, c, h, w), dtype=jnp.float32)
    patch = jax.random.normal(kp, (1, h, w), dtype=jnp.float32)

    out = location_attention_layer(x, patch)
    jax.block_until_ready(out)
    ref = jax.nn.sigmoid(x * patch[None, :, :, :])
    assert out.shape == (bt, c, h, w)
    assert jnp.allclose(out, ref, atol=1e-5), "mismatch vs reference (case 1)"

    # Case 2: kernel_size = 7 (hw = 49, not a multiple of 128) with bt*c = 128
    # so the row->lane folding path is exercised.
    bt2, c2, h2, w2 = 4, 32, 7, 7
    x2 = jax.random.normal(kx2, (bt2, c2, h2, w2), dtype=jnp.float32)
    patch2 = jax.random.normal(kp2, (1, h2, w2), dtype=jnp.float32)

    out2 = location_attention_layer(x2, patch2)
    jax.block_until_ready(out2)
    ref2 = jax.nn.sigmoid(x2 * patch2[None, :, :, :])
    assert out2.shape == (bt2, c2, h2, w2)
    assert jnp.allclose(out2, ref2, atol=1e-5), "mismatch vs reference (case 2)"

    print("KERNEL_OK")
</pallas_src>

<mosaic_0001>
module attributes {stable_mosaic.version = 11 : i64} {
  func.func @_loc_attn_kernel(%arg0: i32, %arg1: memref<8x256xf32, #tpu.memory_space<vmem>>, %arg2: memref<1x256xf32, #tpu.memory_space<vmem>>, %arg3: memref<8x256xf32, #tpu.memory_space<vmem>>) attributes {dimension_semantics = [#tpu.dimension_semantics<parallel>], iteration_bounds = array<i64: 1>, scalar_prefetch = 0 : i64, scratch_operands = 0 : i64, tpu.core_type = #tpu.core_type<tc>, window_params = [{transform_indices = @transform_0, window_bounds = array<i64: 8, 256>}, {pipeline_mode = #tpu.pipeline_mode<synchronous>, transform_indices = @transform_1, window_bounds = array<i64: 1, 256>}, {transform_indices = @transform_2, window_bounds = array<i64: 8, 256>}]} {
    %c0 = arith.constant 0 : index
    %c0_0 = arith.constant 0 : index
    %0 = vector.load %arg1[%c0, %c0_0] : memref<8x256xf32, #tpu.memory_space<vmem>>, vector<8x256xf32>
    %c0_1 = arith.constant 0 : index
    %c0_2 = arith.constant 0 : index
    %1 = vector.load %arg2[%c0_1, %c0_2] : memref<1x256xf32, #tpu.memory_space<vmem>>, vector<1x256xf32>
    %2 = vector.broadcast %1 : vector<1x256xf32> to vector<8x256xf32>
    %3 = arith.mulf %0, %2 : vector<8x256xf32>
    %cst = arith.constant 5.000000e-01 : f32
    %4 = vector.broadcast %cst : f32 to vector<8x256xf32>
    %5 = arith.mulf %4, %3 : vector<8x256xf32>
    %6 = math.tanh %5 : vector<8x256xf32>
    %cst_3 = arith.constant 5.000000e-01 : f32
    %7 = vector.broadcast %cst_3 : f32 to vector<8x256xf32>
    %8 = arith.mulf %7, %6 : vector<8x256xf32>
    %cst_4 = arith.constant 5.000000e-01 : f32
    %9 = vector.broadcast %cst_4 : f32 to vector<8x256xf32>
    %10 = arith.addf %8, %9 : vector<8x256xf32>
    %c0_5 = arith.constant 0 : index
    %c0_6 = arith.constant 0 : index
    %11 = vector.load %arg3[%c0_5, %c0_6] : memref<8x256xf32, #tpu.memory_space<vmem>>, vector<8x256xf32>
    tpu.vector_store %arg3[%c0_5, %c0_6], %10 {strides = array<i32>} : memref<8x256xf32, #tpu.memory_space<vmem>>, vector<8x256xf32>,
    return
  }
  func.func @transform_0(%arg0: i32) -> (i32, i32) {
    %c0_i32 = arith.constant 0 : i32
    %c0_i32_0 = arith.constant 0 : i32
    return %arg0, %c0_i32 : i32, i32
  }
  func.func @transform_1(%arg0: i32) -> (i32, i32) {
    %c0_i32 = arith.constant 0 : i32
    %c0_i32_0 = arith.constant 0 : i32
    %c0_i32_1 = arith.constant 0 : i32
    return %c0_i32, %c0_i32_0 : i32, i32
  }
  func.func @transform_2(%arg0: i32) -> (i32, i32) {
    %c0_i32 = arith.constant 0 : i32
    %c0_i32_0 = arith.constant 0 : i32
    return %arg0, %c0_i32 : i32, i32
  }
}

</mosaic_0001>

<llo_original>
// kernel: tpu_custom_call.1
$region0: #{tpu_custom_call.1}
  #allocation0 [shape = 'u32[]', space=smem, size = 0x4, offset = 0x4, fixed_abs, tag = 'smem constant byte address 0x4 - core index']
  #allocation1 [shape = 'u32[144,128]{1,0:T(1,128)}', space=vmem, size = 0x12000, scoped, tag = 'internal scratch']
  %s0 = inlined_call_operand.hbm [shape: f32[8,256], index: 0, kind: input, shape index: {}]
  %s1 = inlined_call_operand.vmem [shape: f32[1,256], index: 1, kind: input, shape index: {}]
  %s2 = inlined_call_operand.hbm [shape: f32[8,256], index: 2, kind: output, shape index: {}]
  %s3 = sld [smem:[#allocation0]]
  $region22: #{tpu_custom_call.1} parent=0
    _
  %s5 = ssub.s32 1, %s3
  %s6 = scalar_select 0, %s5, %s3
  $region1: #{tpu_custom_call.1} parent=0
    #allocation2 [shape = 'u8[8192]{0}', space=vmem, size = 0x2000, scoped, tag = 'input window, operand 0, single buffered']
    #allocation3 [shape = 's32[1]{0}', space=sflag, size = 0x4, scoped, tag = 'scoped memory for tpu_custom_call.1']
    #allocation4 [shape = 's32[1]{0}', space=sflag, size = 0x4, scoped, tag = 'scoped memory for tpu_custom_call.1']
    #allocation5 [shape = 'u8[8192]{0}', space=vmem, size = 0x2000, scoped, tag = 'output window, operand 0, single buffered']
    %7 = vsyncpa [#allocation3], 0
    %8 = vsyncpa [#allocation4], 0
    // Predicated region
    $region2: #{tpu_custom_call.1} parent=1 // pred_check
      _
    $region3: #{tpu_custom_call.1} parent=1 // pred_check_branch
      %10 = sbr.rel (0) target = $region5
    $region4: #{tpu_custom_call.1} parent=1 // pred_region
      %s12 = ssub.s32 256, 256
      %13 = vsyncadd [#allocation3], %s12
      %s15 = sshll.u32 [#allocation2], 4
      %s16 = int_to_ptr.vmem [resolvable:$true] %s15
      %18 = dma.hbm_to_vmem [thread:$0]  %s0, 256, %s16, [#allocation3]
    $region5: #{tpu_custom_call.1} parent=1 // pred_fallthru
      _
    // Predicated region
    $region6: #{tpu_custom_call.1} parent=1 // pred_check
      _
    $region7: #{tpu_custom_call.1} parent=1 // pred_check_branch
      %20 = sbr.rel (0) target = $region9
    $region8: #{tpu_custom_call.1} parent=1 // pred_region
      _
    $region9: #{tpu_custom_call.1} parent=1 // pred_fallthru
      _
    // Predicated region
    $region10: #{tpu_custom_call.1} parent=1 // pred_check
      _
    $region11: #{tpu_custom_call.1} parent=1 // pred_check_branch
      %22 = sbr.rel (0) target = $region13
    $region12: #{tpu_custom_call.1} parent=1 // pred_region
      %23 = dma.done [#allocation3], 256
    $region13: #{tpu_custom_call.1} parent=1 // pred_fallthru
      _
    %v24 = vld [vmem:[#allocation2] sm:$0xff]
    %v25 = vld [vmem:[#allocation2 + $0x8] sm:$0xff]
    %v26 = vld [vmem:[%s1] sm:$0x3]
    %v28 = vlaneseq
    %v29 = vshrl.u32 %v28, 7
    %v30 = vsub.s32 0, %v29
    %v31 = vrot.slane %v26, %v30
    %v32 = vlaneseq
    %v33 = vshrl.u32 %v32, 7
    %v34 = vsub.s32 1, %v33
    %v35 = vrot.slane %v26, %v34
    %v38 = vmul.f32 %v24, %v31
    %v39 = vmul.f32 %v25, %v35
    %v40 = vmul.f32 %v38, 0.5
    %v41 = vmul.f32 %v39, 0.5
    %v42 = vtanh.pop %v40
    %v43 = vtanh.pop %v41
    %v44 = vmul.f32 %v42, 0.5
    %v45 = vmul.f32 %v43, 0.5
    %v46 = vadd.f32 %v44, 0.5
    %v47 = vadd.f32 %v45, 0.5
    %48 = vst [vmem:[#allocation5] sm:$0xff] %v46
    %49 = vst [vmem:[#allocation5 + $0x8] sm:$0xff] %v47
    // Predicated region
    $region14: #{tpu_custom_call.1} parent=1 // pred_check
      _
    $region15: #{tpu_custom_call.1} parent=1 // pred_check_branch
      %51 = sbr.rel (0) target = $region17
    $region16: #{tpu_custom_call.1} parent=1 // pred_region
      %s53 = ssub.s32 256, 256
      %54 = vsyncadd [#allocation4], %s53
      %s56 = sshll.u32 [#allocation5], 4
      %s57 = int_to_ptr.vmem [resolvable:$true] %s56
      %59 = dma.vmem_to_hbm [thread:$0]  %s57, 256, %s2, [#allocation4]
    $region17: #{tpu_custom_call.1} parent=1 // pred_fallthru
      _
    // Predicated region
    $region18: #{tpu_custom_call.1} parent=1 // pred_check
      _
    $region19: #{tpu_custom_call.1} parent=1 // pred_check_branch
      %61 = sbr.rel (0) target = $region21
    $region20: #{tpu_custom_call.1} parent=1 // pred_region
      %62 = dma.done [#allocation4], 256
    $region21: #{tpu_custom_call.1} parent=1 // pred_fallthru
      _
    %63 = vsyncpa [#allocation3], 1
    %64 = vsyncpa [#allocation4], 1

</llo_original>
